<compile_context>
chip_gen: v7x
topology: tpu7x:2x2x1
jax: 0.10.0
libtpu: 0.0.40
codegen_flags: <defaults>
</compile_context>

<pallas_src>
import functools
import math
from typing import NamedTuple, Tuple

import jax
import jax.numpy as jnp
from jax import lax
from jax.experimental import pallas as pl
from jax.experimental.pallas import tpu as pltpu


LANES = 128
MAX_BLOCK_ROWS = 2048                  # (2048,128) f32 = 1 MiB per array tile
MAX_BLOCK_ROWS_SEQ = 1024              # leave VMEM room for the T-chunk buffers
TARGET_CHUNK_BYTES = 4 * 1024 * 1024   # per x-chunk DMA target in the seq kernel
VMEM_LIMIT_BYTES = 48 * 1024 * 1024    # stays under v7x's 64 MiB per-TC VMEM


class LSNNParameters(NamedTuple):
    tau_syn_inv: float = 1.0 / 5e-3
    tau_mem_inv: float = 1.0 / 1e-2
    tau_adapt_inv: float = 1.0 / 700.0
    v_leak: float = 0.0
    v_th: float = 1.0
    v_reset: float = 0.0
    beta: float = 1.8
    method: str = "super"
    alpha: float = 100.0


class LSNNFeedForwardState(NamedTuple):
    v: jax.Array
    i: jax.Array
    b: jax.Array


class _FoldedConstants(NamedTuple):
    a_v: float     # 1 - dt*tau_mem_inv
    k_v: float     # dt*tau_mem_inv
    c_v: float     # dt*tau_mem_inv*v_leak
    a_i: float     # 1 - dt*tau_syn_inv
    a_b: float     # 1 - dt*tau_adapt_inv
    c_b: float     # dt*tau_adapt_inv*v_th
    v_reset: float
    beta_eff: float  # tau_adapt_inv*beta


def _fold_constants(p: LSNNParameters, dt: float) -> _FoldedConstants:
    k_v = dt * p.tau_mem_inv
    k_b = dt * p.tau_adapt_inv
    return _FoldedConstants(
        a_v=1.0 - k_v, k_v=k_v, c_v=k_v * p.v_leak,
        a_i=1.0 - dt * p.tau_syn_inv,
        a_b=1.0 - k_b, c_b=k_b * p.v_th,
        v_reset=p.v_reset,
        beta_eff=p.tau_adapt_inv * p.beta)


def _round_up(n: int, m: int) -> int:
    return ((n + m - 1) // m) * m


def _choose_block_rows(n_rows: int, max_rows: int, granule: int,
                       min_grid_steps: int = 8, min_rows: int = 512) -> int:
    """Pick a row-block size: aim for >= min_grid_steps grid steps (pipelining
    overlap + 2-TC split on v7x) but never below ~512 rows (85% HBM roofline),
    never above max_rows, and never (much) above the array itself."""
    target = pl.cdiv(n_rows, min_grid_steps)
    rows = max(target, min_rows)
    rows = min(rows, max_rows, _round_up(n_rows, granule))
    return max(granule, _round_up(rows, granule))


def _lsnn_update(x, v, i, b, c: _FoldedConstants):
    """One elementwise LSNN Euler step (folded-constant form, shared by the
    Pallas kernels and the pure-JAX reference/fallback)."""
    v_dec = c.a_v * v + c.k_v * i
    if c.c_v != 0.0:
        v_dec = v_dec + c.c_v
    i_dec = c.a_i * i
    b_dec = c.a_b * b + c.c_b
    spike = v_dec > b_dec                         # heaviside, strict '>'
    v_new = jnp.where(spike, c.v_reset, v_dec)
    i_new = i_dec + x
    b_new = jnp.where(spike, b_dec + c.beta_eff, b_dec)
    return spike, v_new, i_new, b_new


# ----------------------------------------------------------------------------
# Pure-JAX reference / fallback (also used for lane-unaligned element counts:
# XLA's fused elementwise path is already at HBM roofline and padding whole
# arrays to lane granularity would only add HBM copies).
# ----------------------------------------------------------------------------
def _lsnn_step_jax(x, state, c):
    spike, v, i, b = _lsnn_update(x, state.v, state.i, state.b, c)
    return spike.astype(x.dtype), LSNNFeedForwardState(v, i, b)


def _lsnn_sequence_jax(xs, state, c, z_dtype):
    def step(s, x):
        spike, v, i, b = _lsnn_update(x, s.v, s.i, s.b, c)
        return LSNNFeedForwardState(v, i, b), spike.astype(z_dtype)
    final, zs = lax.scan(step, state, xs)
    return zs, final


# ----------------------------------------------------------------------------
# Single-step kernel
# ----------------------------------------------------------------------------
def _step_kernel(x_ref, v_ref, i_ref, b_ref,
                 z_out, v_out, i_out, b_out, *, c):
    spike, v_new, i_new, b_new = _lsnn_update(
        x_ref[...], v_ref[...], i_ref[...], b_ref[...], c)
    z_out[...] = spike.astype(jnp.float32).astype(z_out.dtype)
    v_out[...] = v_new
    i_out[...] = i_new
    b_out[...] = b_new


def lsnn_feed_forward_step_pallas(
    input_tensor: jax.Array,
    state: LSNNFeedForwardState,
    p: LSNNParameters = LSNNParameters(),
    dt: float = 0.001,
) -> Tuple[jax.Array, LSNNFeedForwardState]:
    c = _fold_constants(p, dt)
    shape = input_tensor.shape
    dtype = input_tensor.dtype
    total = math.prod(shape)

    if total == 0 or total % LANES != 0:
        return _lsnn_step_jax(input_tensor, state, c)

    R = total // LANES
    granule = max(8, 32 // dtype.itemsize)
    block_rows = _choose_block_rows(R, MAX_BLOCK_ROWS, granule)
    grid = (pl.cdiv(R, block_rows),)

    # zero-copy reshapes (no pad / slice round-trips)
    x2 = input_tensor.reshape(R, LANES)
    v2 = state.v.reshape(R, LANES)
    i2 = state.i.reshape(R, LANES)
    b2 = state.b.reshape(R, LANES)

    blk = pl.BlockSpec((block_rows, LANES), lambda r: (r, 0))
    out_shape = tuple(jax.ShapeDtypeStruct((R, LANES), dtype) for _ in range(4))

    z2, vn2, in2, bn2 = pl.pallas_call(
        functools.partial(_step_kernel, c=c),
        out_shape=out_shape,
        grid_spec=pltpu.PrefetchScalarGridSpec(
            num_scalar_prefetch=0,
            grid=grid,
            in_specs=[blk, blk, blk, blk],
            out_specs=[blk, blk, blk, blk]),
        # Note: no input_output_aliases -- without caller-side donation XLA
        # would insert defensive copies of the aliased state buffers.
        compiler_params=pltpu.CompilerParams(
            dimension_semantics=("parallel",),
            vmem_limit_bytes=VMEM_LIMIT_BYTES),
    )(x2, v2, i2, b2)

    z = z2.reshape(shape)
    new_state = LSNNFeedForwardState(
        v=vn2.reshape(shape), i=in2.reshape(shape), b=bn2.reshape(shape))
    return z, new_state


# ----------------------------------------------------------------------------
# Time-fused, T-chunked sequence kernel: v/i/b stay resident in VMEM scratch
# across all T steps; the grid is (row_blocks [parallel], T-chunks [arbitrary])
# and each grid step walks `t_chunk` time steps with an in-kernel fori_loop,
# reading x and writing z in (t_chunk, block_rows, 128) slabs.
# ----------------------------------------------------------------------------
def _seq_kernel(x_ref, v0_ref, i0_ref, b0_ref,
                z_out, vf_out, if_out, bf_out,
                v_sc, i_sc, b_sc, *, c, t_total, t_chunk):
    tc = pl.program_id(1)

    @pl.when(tc == 0)
    def _init():
        v_sc[...] = v0_ref[...]
        i_sc[...] = i0_ref[...]
        b_sc[...] = b0_ref[...]

    def body(t, carry):
        spike, v_new, i_new, b_new = _lsnn_update(
            x_ref[t], v_sc[...], i_sc[...], b_sc[...], c)
        z_out[t] = spike.astype(jnp.float32).astype(z_out.dtype)
        v_sc[...] = v_new
        i_sc[...] = i_new
        b_sc[...] = b_new
        return carry

    if t_total % t_chunk == 0:
        lax.fori_loop(0, t_chunk, body, 0, unroll=t_chunk <= 8)
    else:
        # ragged last T-chunk: only run the valid steps so state stays correct
        n_valid = jnp.minimum(t_chunk, t_total - tc * t_chunk)
        lax.fori_loop(0, n_valid, body, 0)

    @pl.when(tc == pl.num_programs(1) - 1)
    def _finalize():
        vf_out[...] = v_sc[...]
        if_out[...] = i_sc[...]
        bf_out[...] = b_sc[...]


def lsnn_feed_forward_sequence_pallas(
    input_seq: jax.Array,                 # (T, *step_shape)
    state: LSNNFeedForwardState,
    p: LSNNParameters = LSNNParameters(),
    dt: float = 0.001,
    z_dtype=jnp.bfloat16,                 # spikes are exactly {0,1}: lossless
) -> Tuple[jax.Array, LSNNFeedForwardState]:
    c = _fold_constants(p, dt)
    T = input_seq.shape[0]
    step_shape = input_seq.shape[1:]
    dtype = input_seq.dtype
    z_dtype = jnp.dtype(z_dtype)
    total = math.prod(step_shape)

    if T == 0 or total == 0 or total % LANES != 0:
        return _lsnn_sequence_jax(input_seq, state, c, z_dtype)

    R = total // LANES
    granule = max(8, 32 // dtype.itemsize, 32 // z_dtype.itemsize)
    block_rows = _choose_block_rows(R, MAX_BLOCK_ROWS_SEQ, granule)
    n_rb = pl.cdiv(R, block_rows)
    t_chunk = max(1, min(T, TARGET_CHUNK_BYTES // (block_rows * LANES * dtype.itemsize)))
    n_tc = pl.cdiv(T, t_chunk)
    grid = (n_rb, n_tc)

    # zero-copy reshapes
    xs = input_seq.reshape(T, R, LANES)
    v2 = state.v.reshape(R, LANES)
    i2 = state.i.reshape(R, LANES)
    b2 = state.b.reshape(R, LANES)

    xz_spec = pl.BlockSpec((t_chunk, block_rows, LANES), lambda r, t: (t, r, 0))
    # state blocks indexed only by the row axis -> not re-DMAed along T
    s_spec = pl.BlockSpec((block_rows, LANES), lambda r, t: (r, 0))

    out_shape = (
        jax.ShapeDtypeStruct((T, R, LANES), z_dtype),
        jax.ShapeDtypeStruct((R, LANES), dtype),
        jax.ShapeDtypeStruct((R, LANES), dtype),
        jax.ShapeDtypeStruct((R, LANES), dtype),
    )

    z3, vf2, if2, bf2 = pl.pallas_call(
        functools.partial(_seq_kernel, c=c, t_total=T, t_chunk=t_chunk),
        out_shape=out_shape,
        grid_spec=pltpu.PrefetchScalarGridSpec(
            num_scalar_prefetch=0,
            grid=grid,
            in_specs=[xz_spec, s_spec, s_spec, s_spec],
            out_specs=[xz_spec, s_spec, s_spec, s_spec],
            scratch_shapes=[pltpu.VMEM((block_rows, LANES), dtype)] * 3),
        compiler_params=pltpu.CompilerParams(
            dimension_semantics=("parallel", "arbitrary"),
            vmem_limit_bytes=VMEM_LIMIT_BYTES),
    )(xs, v2, i2, b2)

    z_seq = z3.reshape((T,) + step_shape)
    final_state = LSNNFeedForwardState(
        v=vf2.reshape(step_shape), i=if2.reshape(step_shape),
        b=bf2.reshape(step_shape))
    return z_seq, final_state


class LSNNFeedForwardCell:
    """JAX/Pallas port of norse LSNNFeedForwardCell (forward pass only)."""

    def __init__(self, shape, p: LSNNParameters = LSNNParameters(), dt: float = 0.001):
        self.shape = shape
        self.p = p
        self.dt = dt
        self._step = jax.jit(functools.partial(
            lsnn_feed_forward_step_pallas, p=self.p, dt=self.dt))
        self._seq = jax.jit(functools.partial(
            lsnn_feed_forward_sequence_pallas, p=self.p, dt=self.dt))

    def initial_state(self, batch_size, dtype=jnp.float32) -> LSNNFeedForwardState:
        zeros = jnp.zeros((batch_size, *self.shape), dtype=dtype)
        return LSNNFeedForwardState(v=zeros, i=zeros, b=zeros)

    def __call__(self, input_tensor, state):
        return self._step(input_tensor, state)

    def forward_sequence(self, input_seq, state):
        return self._seq(input_seq, state)


if __name__ == "__main__":
    import numpy as np

    key = jax.random.PRNGKey(0)
    k_x, k_v, k_i, k_b, k_xs, k_v2, k_i2, k_b2 = jax.random.split(key, 8)

    B, C, H, W = 2, 4, 16, 16   # NCHW-shaped input, cell shape=(C, H, W)
    T = 8
    cell = LSNNFeedForwardCell(shape=(C, H, W))
    consts = _fold_constants(cell.p, cell.dt)

    # ---- single-step test ----
    x = jax.random.uniform(k_x, (B, C, H, W), dtype=jnp.float32)
    state = LSNNFeedForwardState(
        v=jax.random.uniform(k_v, (B, C, H, W), dtype=jnp.float32) * 2.0,
        i=jax.random.uniform(k_i, (B, C, H, W), dtype=jnp.float32),
        b=jax.random.uniform(k_b, (B, C, H, W), dtype=jnp.float32),
    )
    z_ref, s_ref = _lsnn_step_jax(x, state, consts)

    z, new_state = cell(x, state)
    jax.block_until_ready((z, new_state))

    np.testing.assert_allclose(np.asarray(z), np.asarray(z_ref), rtol=1e-6, atol=1e-6)
    np.testing.assert_allclose(np.asarray(new_state.v), np.asarray(s_ref.v), rtol=1e-6, atol=1e-6)
    np.testing.assert_allclose(np.asarray(new_state.i), np.asarray(s_ref.i), rtol=1e-6, atol=1e-6)
    np.testing.assert_allclose(np.asarray(new_state.b), np.asarray(s_ref.b), rtol=1e-6, atol=1e-6)

    # ---- time-fused sequence test ----
    x_seq = jax.random.uniform(k_xs, (T, B, C, H, W), dtype=jnp.float32)
    state0 = LSNNFeedForwardState(
        v=jax.random.uniform(k_v2, (B, C, H, W), dtype=jnp.float32) * 2.0,
        i=jax.random.uniform(k_i2, (B, C, H, W), dtype=jnp.float32),
        b=jax.random.uniform(k_b2, (B, C, H, W), dtype=jnp.float32),
    )
    zs_ref, s_last = _lsnn_sequence_jax(x_seq, state0, consts, jnp.float32)

    z_seq, final_state = cell.forward_sequence(x_seq, state0)
    jax.block_until_ready((z_seq, final_state))

    np.testing.assert_allclose(np.asarray(z_seq.astype(jnp.float32)),
                               np.asarray(zs_ref), rtol=1e-5, atol=1e-5)
    np.testing.assert_allclose(np.asarray(final_state.v), np.asarray(s_last.v), rtol=1e-5, atol=1e-5)
    np.testing.assert_allclose(np.asarray(final_state.i), np.asarray(s_last.i), rtol=1e-5, atol=1e-5)
    np.testing.assert_allclose(np.asarray(final_state.b), np.asarray(s_last.b), rtol=1e-5, atol=1e-5)

    print("KERNEL_OK")
</pallas_src>

<mosaic_0001>
module attributes {stable_mosaic.version = 11 : i64} {
  func.func @_step_kernel(%arg0: i32, %arg1: memref<16x128xf32, #tpu.memory_space<vmem>>, %arg2: memref<16x128xf32, #tpu.memory_space<vmem>>, %arg3: memref<16x128xf32, #tpu.memory_space<vmem>>, %arg4: memref<16x128xf32, #tpu.memory_space<vmem>>, %arg5: memref<16x128xf32, #tpu.memory_space<vmem>>, %arg6: memref<16x128xf32, #tpu.memory_space<vmem>>, %arg7: memref<16x128xf32, #tpu.memory_space<vmem>>, %arg8: memref<16x128xf32, #tpu.memory_space<vmem>>) attributes {dimension_semantics = [#tpu.dimension_semantics<parallel>], iteration_bounds = array<i64: 1>, scalar_prefetch = 0 : i64, scratch_operands = 0 : i64, tpu.core_type = #tpu.core_type<tc>, window_params = [{transform_indices = @transform_0, window_bounds = array<i64: 16, 128>}, {transform_indices = @transform_1, window_bounds = array<i64: 16, 128>}, {transform_indices = @transform_2, window_bounds = array<i64: 16, 128>}, {transform_indices = @transform_3, window_bounds = array<i64: 16, 128>}, {transform_indices = @transform_4, window_bounds = array<i64: 16, 128>}, {transform_indices = @transform_5, window_bounds = array<i64: 16, 128>}, {transform_indices = @transform_6, window_bounds = array<i64: 16, 128>}, {transform_indices = @transform_7, window_bounds = array<i64: 16, 128>}]} {
    %c0 = arith.constant 0 : index
    %c0_0 = arith.constant 0 : index
    %0 = vector.load %arg1[%c0, %c0_0] : memref<16x128xf32, #tpu.memory_space<vmem>>, vector<16x128xf32>
    %c0_1 = arith.constant 0 : index
    %c0_2 = arith.constant 0 : index
    %1 = vector.load %arg2[%c0_1, %c0_2] : memref<16x128xf32, #tpu.memory_space<vmem>>, vector<16x128xf32>
    %c0_3 = arith.constant 0 : index
    %c0_4 = arith.constant 0 : index
    %2 = vector.load %arg3[%c0_3, %c0_4] : memref<16x128xf32, #tpu.memory_space<vmem>>, vector<16x128xf32>
    %c0_5 = arith.constant 0 : index
    %c0_6 = arith.constant 0 : index
    %3 = vector.load %arg4[%c0_5, %c0_6] : memref<16x128xf32, #tpu.memory_space<vmem>>, vector<16x128xf32>
    %cst = arith.constant 0.899999976 : f32
    %4 = vector.broadcast %cst : f32 to vector<16x128xf32>
    %5 = arith.mulf %4, %1 : vector<16x128xf32>
    %cst_7 = arith.constant 1.000000e-01 : f32
    %6 = vector.broadcast %cst_7 : f32 to vector<16x128xf32>
    %7 = arith.mulf %6, %2 : vector<16x128xf32>
    %8 = arith.addf %5, %7 : vector<16x128xf32>
    %cst_8 = arith.constant 8.000000e-01 : f32
    %9 = vector.broadcast %cst_8 : f32 to vector<16x128xf32>
    %10 = arith.mulf %9, %2 : vector<16x128xf32>
    %cst_9 = arith.constant 0.999998569 : f32
    %11 = vector.broadcast %cst_9 : f32 to vector<16x128xf32>
    %12 = arith.mulf %11, %3 : vector<16x128xf32>
    %cst_10 = arith.constant 1.42857141E-6 : f32
    %13 = vector.broadcast %cst_10 : f32 to vector<16x128xf32>
    %14 = arith.addf %12, %13 : vector<16x128xf32>
    %15 = arith.cmpf ogt, %8, %14 : vector<16x128xf32>
    %cst_11 = arith.constant 0.000000e+00 : f32
    %16 = vector.broadcast %cst_11 : f32 to vector<16x128xf32>
    %17 = arith.select %15, %16, %8 : vector<16x128xi1>, vector<16x128xf32>
    %18 = arith.addf %10, %0 : vector<16x128xf32>
    %cst_12 = arith.constant 0.00257142866 : f32
    %19 = vector.broadcast %cst_12 : f32 to vector<16x128xf32>
    %20 = arith.addf %14, %19 : vector<16x128xf32>
    %21 = arith.select %15, %20, %14 : vector<16x128xi1>, vector<16x128xf32>
    %22 = arith.extui %15 : vector<16x128xi1> to vector<16x128xi32>
    %23 = arith.sitofp %22 : vector<16x128xi32> to vector<16x128xf32>
    %c0_13 = arith.constant 0 : index
    %c0_14 = arith.constant 0 : index
    %24 = vector.load %arg5[%c0_13, %c0_14] : memref<16x128xf32, #tpu.memory_space<vmem>>, vector<16x128xf32>
    tpu.vector_store %arg5[%c0_13, %c0_14], %23 {strides = array<i32>} : memref<16x128xf32, #tpu.memory_space<vmem>>, vector<16x128xf32>,
    %c0_15 = arith.constant 0 : index
    %c0_16 = arith.constant 0 : index
    %25 = vector.load %arg6[%c0_15, %c0_16] : memref<16x128xf32, #tpu.memory_space<vmem>>, vector<16x128xf32>
    tpu.vector_store %arg6[%c0_15, %c0_16], %17 {strides = array<i32>} : memref<16x128xf32, #tpu.memory_space<vmem>>, vector<16x128xf32>,
    %c0_17 = arith.constant 0 : index
    %c0_18 = arith.constant 0 : index
    %26 = vector.load %arg7[%c0_17, %c0_18] : memref<16x128xf32, #tpu.memory_space<vmem>>, vector<16x128xf32>
    tpu.vector_store %arg7[%c0_17, %c0_18], %18 {strides = array<i32>} : memref<16x128xf32, #tpu.memory_space<vmem>>, vector<16x128xf32>,
    %c0_19 = arith.constant 0 : index
    %c0_20 = arith.constant 0 : index
    %27 = vector.load %arg8[%c0_19, %c0_20] : memref<16x128xf32, #tpu.memory_space<vmem>>, vector<16x128xf32>
    tpu.vector_store %arg8[%c0_19, %c0_20], %21 {strides = array<i32>} : memref<16x128xf32, #tpu.memory_space<vmem>>, vector<16x128xf32>,
    return
  }
  func.func @transform_0(%arg0: i32) -> (i32, i32) {
    %c0_i32 = arith.constant 0 : i32
    %c0_i32_0 = arith.constant 0 : i32
    return %arg0, %c0_i32 : i32, i32
  }
  func.func @transform_1(%arg0: i32) -> (i32, i32) {
    %c0_i32 = arith.constant 0 : i32
    %c0_i32_0 = arith.constant 0 : i32
    return %arg0, %c0_i32 : i32, i32
  }
  func.func @transform_2(%arg0: i32) -> (i32, i32) {
    %c0_i32 = arith.constant 0 : i32
    %c0_i32_0 = arith.constant 0 : i32
    return %arg0, %c0_i32 : i32, i32
  }
  func.func @transform_3(%arg0: i32) -> (i32, i32) {
    %c0_i32 = arith.constant 0 : i32
    %c0_i32_0 = arith.constant 0 : i32
    return %arg0, %c0_i32 : i32, i32
  }
  func.func @transform_4(%arg0: i32) -> (i32, i32) {
    %c0_i32 = arith.constant 0 : i32
    %c0_i32_0 = arith.constant 0 : i32
    return %arg0, %c0_i32 : i32, i32
  }
  func.func @transform_5(%arg0: i32) -> (i32, i32) {
    %c0_i32 = arith.constant 0 : i32
    %c0_i32_0 = arith.constant 0 : i32
    return %arg0, %c0_i32 : i32, i32
  }
  func.func @transform_6(%arg0: i32) -> (i32, i32) {
    %c0_i32 = arith.constant 0 : i32
    %c0_i32_0 = arith.constant 0 : i32
    return %arg0, %c0_i32 : i32, i32
  }
  func.func @transform_7(%arg0: i32) -> (i32, i32) {
    %c0_i32 = arith.constant 0 : i32
    %c0_i32_0 = arith.constant 0 : i32
    return %arg0, %c0_i32 : i32, i32
  }
}

</mosaic_0001>

<llo_original>
// kernel: lsnn_feed_forward_step_pallas.1
$region0: #{lsnn_feed_forward_step_pallas.1}
  #allocation0 [shape = 'u32[]', space=smem, size = 0x4, offset = 0x4, fixed_abs, tag = 'smem constant byte address 0x4 - core index']
  #allocation1 [shape = 'u32[144,128]{1,0:T(1,128)}', space=vmem, size = 0x12000, scoped, tag = 'internal scratch']
  %s0 = inlined_call_operand.vmem [shape: f32[16,128], index: 0, kind: input, shape index: {}]
  %s1 = inlined_call_operand.vmem [shape: f32[16,128], index: 1, kind: input, shape index: {}]
  %s2 = inlined_call_operand.vmem [shape: f32[16,128], index: 2, kind: input, shape index: {}]
  %s3 = inlined_call_operand.vmem [shape: f32[16,128], index: 3, kind: input, shape index: {}]
  %s4 = inlined_call_operand.vmem [shape: f32[16,128], index: 4, kind: output, shape index: {0}]
  %s5 = inlined_call_operand.vmem [shape: f32[16,128], index: 5, kind: output, shape index: {1}]
  %s6 = inlined_call_operand.vmem [shape: f32[16,128], index: 6, kind: output, shape index: {2}]
  %s7 = inlined_call_operand.vmem [shape: f32[16,128], index: 7, kind: output, shape index: {3}]
  %8 = xla_tuple %s4, %s5, %s6, %s7
  %s9 = sld [smem:[#allocation0]]
  $region50: #{lsnn_feed_forward_step_pallas.1} parent=0
    _
  %s11 = ssub.s32 1, %s9
  %s12 = scalar_select 0, %s11, %s9
  // Predicated region
  $region2: #{lsnn_feed_forward_step_pallas.1} parent=0 // pred_check
    _
  $region3: #{lsnn_feed_forward_step_pallas.1} parent=0 // pred_check_branch
    %14 = sbr.rel (0) target = $region5
  $region4: #{lsnn_feed_forward_step_pallas.1} parent=0 // pred_region
    _
  $region5: #{lsnn_feed_forward_step_pallas.1} parent=0 // pred_fallthru
    _
  // Predicated region
  $region6: #{lsnn_feed_forward_step_pallas.1} parent=0 // pred_check
    _
  $region7: #{lsnn_feed_forward_step_pallas.1} parent=0 // pred_check_branch
    %16 = sbr.rel (0) target = $region9
  $region8: #{lsnn_feed_forward_step_pallas.1} parent=0 // pred_region
    _
  $region9: #{lsnn_feed_forward_step_pallas.1} parent=0 // pred_fallthru
    _
  // Predicated region
  $region10: #{lsnn_feed_forward_step_pallas.1} parent=0 // pred_check
    _
  $region11: #{lsnn_feed_forward_step_pallas.1} parent=0 // pred_check_branch
    %18 = sbr.rel (0) target = $region13
  $region12: #{lsnn_feed_forward_step_pallas.1} parent=0 // pred_region
    _
  $region13: #{lsnn_feed_forward_step_pallas.1} parent=0 // pred_fallthru
    _
  // Predicated region
  $region14: #{lsnn_feed_forward_step_pallas.1} parent=0 // pred_check
    _
  $region15: #{lsnn_feed_forward_step_pallas.1} parent=0 // pred_check_branch
    %20 = sbr.rel (0) target = $region17
  $region16: #{lsnn_feed_forward_step_pallas.1} parent=0 // pred_region
    _
  $region17: #{lsnn_feed_forward_step_pallas.1} parent=0 // pred_fallthru
    _
  %v21 = vld [vmem:[%s0] sm:$0xff]
  %v22 = vld [vmem:[%s0 + $0x8] sm:$0xff]
  %v23 = vld [vmem:[%s1] sm:$0xff]
  %v24 = vld [vmem:[%s1 + $0x8] sm:$0xff]
  %v25 = vld [vmem:[%s2] sm:$0xff]
  %v26 = vld [vmem:[%s2 + $0x8] sm:$0xff]
  %v27 = vld [vmem:[%s3] sm:$0xff]
  %v28 = vld [vmem:[%s3 + $0x8] sm:$0xff]
  %v29 = vmul.f32 %v23, 0.9
  %v30 = vmul.f32 %v24, 0.9
  %v31 = vmul.f32 %v25, 0.1
  %v32 = vmul.f32 %v26, 0.1
  %v33 = vadd.f32 %v29, %v31
  %v34 = vadd.f32 %v30, %v32
  %v35 = vmul.f32 %v25, 0.8
  %v36 = vmul.f32 %v26, 0.8
  %v37 = vmul.f32 %v27, 0.99999857
  %v38 = vmul.f32 %v28, 0.99999857
  %v39 = vadd.f32 %v37, 1.4285714e-06
  %v40 = vadd.f32 %v38, 1.4285714e-06
  %vm41 = vcmp.gt.f32.partialorder %v33, %v39
  %vm42 = vcmp.gt.f32.partialorder %v34, %v40
  %v43 = vsel %vm41, 0.0, %v33
  %v44 = vsel %vm42, 0.0, %v34
  %v45 = vadd.f32 %v35, %v21
  %v46 = vadd.f32 %v36, %v22
  %v47 = vadd.f32 %v39, 0.0025714287
  %v48 = vadd.f32 %v40, 0.0025714287
  %v49 = vsel %vm41, %v47, %v39
  %v50 = vsel %vm42, %v48, %v40
  %v51 = vsel %vm41, 1, 0
  %v52 = vsel %vm42, 1, 0
  %v53 = vcvt.s32.f32 %v51
  %v54 = vcvt.s32.f32 %v52
  %55 = vst [vmem:[%s4] sm:$0xff] %v53
  %56 = vst [vmem:[%s4 + $0x8] sm:$0xff] %v54
  %57 = vst [vmem:[%s5] sm:$0xff] %v43
  %58 = vst [vmem:[%s5 + $0x8] sm:$0xff] %v44
  %59 = vst [vmem:[%s6] sm:$0xff] %v45
  %60 = vst [vmem:[%s6 + $0x8] sm:$0xff] %v46
  %61 = vst [vmem:[%s7] sm:$0xff] %v49
  %62 = vst [vmem:[%s7 + $0x8] sm:$0xff] %v50
  // Predicated region
  $region18: #{lsnn_feed_forward_step_pallas.1} parent=0 // pred_check
    _
  $region19: #{lsnn_feed_forward_step_pallas.1} parent=0 // pred_check_branch
    %64 = sbr.rel (0) target = $region21
  $region20: #{lsnn_feed_forward_step_pallas.1} parent=0 // pred_region
    _
  $region21: #{lsnn_feed_forward_step_pallas.1} parent=0 // pred_fallthru
    _
  // Predicated region
  $region22: #{lsnn_feed_forward_step_pallas.1} parent=0 // pred_check
    _
  $region23: #{lsnn_feed_forward_step_pallas.1} parent=0 // pred_check_branch
    %66 = sbr.rel (0) target = $region25
  $region24: #{lsnn_feed_forward_step_pallas.1} parent=0 // pred_region
    _
  $region25: #{lsnn_feed_forward_step_pallas.1} parent=0 // pred_fallthru
    _
  // Predicated region
  $region26: #{lsnn_feed_forward_step_pallas.1} parent=0 // pred_check
    _
  $region27: #{lsnn_feed_forward_step_pallas.1} parent=0 // pred_check_branch
    %68 = sbr.rel (0) target = $region29
  $region28: #{lsnn_feed_forward_step_pallas.1} parent=0 // pred_region
    _
  $region29: #{lsnn_feed_forward_step_pallas.1} parent=0 // pred_fallthru
    _
  // Predicated region
  $region30: #{lsnn_feed_forward_step_pallas.1} parent=0 // pred_check
    _
  $region31: #{lsnn_feed_forward_step_pallas.1} parent=0 // pred_check_branch
    %70 = sbr.rel (0) target = $region33
  $region32: #{lsnn_feed_forward_step_pallas.1} parent=0 // pred_region
    _
  $region33: #{lsnn_feed_forward_step_pallas.1} parent=0 // pred_fallthru
    _
  // Predicated region
  $region34: #{lsnn_feed_forward_step_pallas.1} parent=0 // pred_check
    _
  $region35: #{lsnn_feed_forward_step_pallas.1} parent=0 // pred_check_branch
    %72 = sbr.rel (0) target = $region37
  $region36: #{lsnn_feed_forward_step_pallas.1} parent=0 // pred_region
    _
  $region37: #{lsnn_feed_forward_step_pallas.1} parent=0 // pred_fallthru
    _
  // Predicated region
  $region38: #{lsnn_feed_forward_step_pallas.1} parent=0 // pred_check
    _
  $region39: #{lsnn_feed_forward_step_pallas.1} parent=0 // pred_check_branch
    %74 = sbr.rel (0) target = $region41
  $region40: #{lsnn_feed_forward_step_pallas.1} parent=0 // pred_region
    _
  $region41: #{lsnn_feed_forward_step_pallas.1} parent=0 // pred_fallthru
    _
  // Predicated region
  $region42: #{lsnn_feed_forward_step_pallas.1} parent=0 // pred_check
    _
  $region43: #{lsnn_feed_forward_step_pallas.1} parent=0 // pred_check_branch
    %76 = sbr.rel (0) target = $region45
  $region44: #{lsnn_feed_forward_step_pallas.1} parent=0 // pred_region
    _
  $region45: #{lsnn_feed_forward_step_pallas.1} parent=0 // pred_fallthru
    _
  // Predicated region
  $region46: #{lsnn_feed_forward_step_pallas.1} parent=0 // pred_check
    _
  $region47: #{lsnn_feed_forward_step_pallas.1} parent=0 // pred_check_branch
    %78 = sbr.rel (0) target = $region49
  $region48: #{lsnn_feed_forward_step_pallas.1} parent=0 // pred_region
    _
  $region49: #{lsnn_feed_forward_step_pallas.1} parent=0 // pred_fallthru
    _

</llo_original>
